<compile_context>
chip_gen: v5e
topology: v5e:2x2
jax: 0.10.0
libtpu: 0.0.40
codegen_flags: <defaults>
</compile_context>

<pallas_src>
import jax
import jax.numpy as jnp
from jax import lax
from jax.experimental import pallas as pl
from jax.experimental.pallas import tpu as pltpu

LN_EPS = 1e-12
NEG_BIG = -1e30   # bias fill for padded vocab columns (exp underflows to 0)


def _gelu(x):
    # tanh-approximation GELU; torch's BertPreTrainingHeads uses erf-based GELU,
    # so parity with PyTorch is approximate (the reference mirrors this approx).
    return 0.5 * x * (1.0 + jnp.tanh(0.7978845608028654 * (x + 0.044715 * x * x * x)))


def _round_up(x, m):
    return ((x + m - 1) // m) * m


def _device_defaults():
    """Generation-aware tile sizes and VMEM limit."""
    kind = ""
    try:
        kind = jax.devices()[0].device_kind.lower()
    except Exception:
        pass
    vmem_bytes = 128 * 1024 * 1024
    try:
        vmem_bytes = int(pltpu.get_tpu_info().vmem_capacity_bytes)
    except Exception:
        pass
    if vmem_bytes <= 80 * 1024 * 1024:
        # v7x-class: 64 MiB physical VMEM -> smaller vocab tile, 48 MiB limit.
        return {"tile_n": 1024, "v_tile": 1024, "vmem_limit": 48 * 1024 * 1024}
    if "v5" in kind:
        # v5e reaches its compute roof around tile_n=512; larger only adds
        # scratch pressure.
        return {"tile_n": 512, "v_tile": 2048, "vmem_limit": 100 * 1024 * 1024}
    # v6e and other 128-MiB-VMEM parts.
    return {"tile_n": 1024, "v_tile": 2048, "vmem_limit": 100 * 1024 * 1024}


# ----------------------------------------------------------------------------
# Stage 1: MLM transform — Linear(H,H) + GELU + LayerNorm, token-tiled.
# ----------------------------------------------------------------------------
def mlm_transform_kernel(x_ref, wt_ref, bt_ref, gamma_ref, beta_ref, ln_ref):
    h = jnp.dot(x_ref[...], wt_ref[...], preferred_element_type=jnp.float32) + bt_ref[...]
    h = _gelu(h)
    mu = jnp.mean(h, axis=-1, keepdims=True)
    var = jnp.mean((h - mu) ** 2, axis=-1, keepdims=True)
    ln = gamma_ref[...] * (h - mu) * lax.rsqrt(var + LN_EPS) + beta_ref[...]
    ln_ref[...] = ln.astype(ln_ref.dtype)


# ----------------------------------------------------------------------------
# Stage 2: streamed decoder matmul + online logsumexp + masked CE.
# Grid: (token_tiles [parallel], vocab_tiles [arbitrary]).
# Each token tile emits one [loss_sum, count] partial (reduced in JAX).
# ----------------------------------------------------------------------------
def mlm_lse_kernel(ln_ref, wdec_ref, bdec_ref, labels_ref, picked_ref, out_ref,
                   m_ref, s_ref):
    j = pl.program_id(1)

    @pl.when(j == 0)
    def _():
        m_ref[...] = jnp.full(m_ref.shape, -jnp.inf, dtype=m_ref.dtype)
        s_ref[...] = jnp.zeros(s_ref.shape, dtype=s_ref.dtype)

    # Decoder logits for this vocab tile (bf16 MXU inputs, f32 accumulate).
    logits = jnp.dot(ln_ref[...], wdec_ref[...],
                     preferred_element_type=jnp.float32) + bdec_ref[...]   # (TN, Vt)

    # Online logsumexp accumulation.  At j==0 the previous-state term vanishes:
    # s==0 and exp(-inf - m_new)==0 (logits are finite; padded columns are -1e30).
    m_tile = jnp.max(logits, axis=-1, keepdims=True)
    m_new = jnp.maximum(m_ref[...], m_tile)
    s_ref[...] = (s_ref[...] * jnp.exp(m_ref[...] - m_new)
                  + jnp.sum(jnp.exp(logits - m_new), axis=-1, keepdims=True))
    m_ref[...] = m_new

    @pl.when(j == pl.num_programs(1) - 1)
    def _():
        lse = m_ref[...] + jnp.log(s_ref[...])
        loss_i = lse - picked_ref[...]                                     # (TN, 1)
        valid = labels_ref[...] != 0                                       # ignore_index = 0
        loss_sum = jnp.sum(jnp.where(valid, loss_i, 0.0))
        cnt = jnp.sum(valid.astype(jnp.float32))
        r = lax.broadcasted_iota(jnp.int32, out_ref.shape, 0)
        c = lax.broadcasted_iota(jnp.int32, out_ref.shape, 1)
        out_ref[...] = (jnp.where((r == 0) & (c == 0), loss_sum, 0.0)
                        + jnp.where((r == 0) & (c == 1), cnt, 0.0))


def mlm_head_loss(x_flat, labels_flat, wt, bt, gamma, beta, wdec, bdec,
                  *, tile_n=None, v_tile=None, vmem_limit=None):
    n, h = x_flat.shape
    v = wdec.shape[1]

    d = _device_defaults()
    if tile_n is None:
        tile_n = d["tile_n"]
    if v_tile is None:
        v_tile = d["v_tile"]
    if vmem_limit is None:
        vmem_limit = d["vmem_limit"]

    # Token tiling (multiple of 8; never larger than the padded token count).
    tile_n = max(8, _round_up(min(tile_n, _round_up(n, 8)), 8))
    n_pad = _round_up(n, tile_n)

    labels_flat = labels_flat.astype(jnp.int32)
    if n_pad != n:
        # Padding rows get label 0 == ignore_index, so they never contribute.
        x_flat = jnp.pad(x_flat, ((0, n_pad - n), (0, 0)))
        labels_flat = jnp.pad(labels_flat, (0, n_pad - n))

    # Vocab tiling: pad V up to a multiple of v_tile (zero wdec columns,
    # -1e30 bias) so the vocab tile never degenerates to the full vocab.
    v_tile = _round_up(min(v_tile, _round_up(v, 128)), 128)
    v_pad = _round_up(v, v_tile)
    wdec_p = wdec if v_pad == v else jnp.pad(wdec, ((0, 0), (0, v_pad - v)))
    bdec_p = bdec.astype(jnp.float32)
    if v_pad != v:
        bdec_p = jnp.pad(bdec_p, (0, v_pad - v), constant_values=NEG_BIG)

    n_tiles = n_pad // tile_n
    n_vtiles = v_pad // v_tile

    # ---- stage 1: MLM transform (Linear + GELU + LayerNorm), bf16 output ----
    ln = pl.pallas_call(
        mlm_transform_kernel,
        out_shape=jax.ShapeDtypeStruct((n_pad, h), jnp.bfloat16),
        grid=(n_tiles,),
        in_specs=[
            pl.BlockSpec((tile_n, h), lambda i: (i, 0)),          # x tile (bf16)
            pl.BlockSpec((h, h), lambda i: (0, 0)),               # transform weight (bf16)
            pl.BlockSpec((1, h), lambda i: (0, 0)),               # transform bias
            pl.BlockSpec((1, h), lambda i: (0, 0)),               # LN gamma
            pl.BlockSpec((1, h), lambda i: (0, 0)),               # LN beta
        ],
        out_specs=pl.BlockSpec((tile_n, h), lambda i: (i, 0)),
        compiler_params=pltpu.CompilerParams(
            dimension_semantics=("parallel",),
            vmem_limit_bytes=vmem_limit,
        ),
    )(x_flat.astype(jnp.bfloat16),
      wt.astype(jnp.bfloat16),
      bt.reshape(1, h).astype(jnp.float32),
      gamma.reshape(1, h).astype(jnp.float32),
      beta.reshape(1, h).astype(jnp.float32))

    # ---- picked logit: one column gather + rowwise dot (outside vocab loop) ----
    idx = jnp.clip(labels_flat, 0, v - 1)
    wcols = jnp.take(wdec.astype(jnp.bfloat16), idx, axis=1).T            # (n_pad, H)
    picked = (jnp.sum(ln.astype(jnp.float32) * wcols.astype(jnp.float32),
                      axis=-1, keepdims=True)
              + bdec.astype(jnp.float32)[idx][:, None])                   # (n_pad, 1)

    # ---- stage 2: streamed decoder + online logsumexp + masked CE ----
    out = pl.pallas_call(
        mlm_lse_kernel,
        out_shape=jax.ShapeDtypeStruct((n_tiles * 8, 128), jnp.float32),
        grid=(n_tiles, n_vtiles),
        in_specs=[
            pl.BlockSpec((tile_n, h), lambda i, j: (i, 0)),       # ln tile (bf16)
            pl.BlockSpec((h, v_tile), lambda i, j: (0, j)),       # decoder weight tile (bf16)
            pl.BlockSpec((1, v_tile), lambda i, j: (0, j)),       # decoder bias tile (f32)
            pl.BlockSpec((tile_n, 1), lambda i, j: (i, 0)),       # labels tile
            pl.BlockSpec((tile_n, 1), lambda i, j: (i, 0)),       # picked logit tile
        ],
        out_specs=pl.BlockSpec((8, 128), lambda i, j: (i, 0)),    # per-token-tile partial
        scratch_shapes=[
            pltpu.VMEM((tile_n, 1), jnp.float32),                 # running max
            pltpu.VMEM((tile_n, 1), jnp.float32),                 # running sum(exp)
        ],
        compiler_params=pltpu.CompilerParams(
            dimension_semantics=("parallel", "arbitrary"),
            vmem_limit_bytes=vmem_limit,
        ),
    )(ln,
      wdec_p.astype(jnp.bfloat16),
      bdec_p.reshape(1, v_pad),
      labels_flat.reshape(n_pad, 1),
      picked.astype(jnp.float32))

    parts = out.reshape(n_tiles, 8, 128)
    loss_sum = jnp.sum(parts[:, 0, 0])
    cnt = jnp.sum(parts[:, 0, 1])
    return loss_sum / jnp.maximum(cnt, 1.0)


# ----------------------------------------------------------------------------
# NSP head (Linear(H,2)) + CE with ignore_index=-1.
# A few kFLOPs: plain JAX (kernel-launch/DMA overhead would dominate).
# ----------------------------------------------------------------------------
def nsp_head_loss(pooled, nsp_labels, w_nsp, b_nsp):
    logits = pooled.astype(jnp.float32) @ w_nsp.astype(jnp.float32) + b_nsp
    labels = nsp_labels.astype(jnp.int32)
    lse = jax.scipy.special.logsumexp(logits, axis=-1)
    picked = jnp.take_along_axis(logits, jnp.maximum(labels, 0)[:, None], axis=-1)[:, 0]
    valid = labels != -1                                                  # ignore_index = -1
    loss_sum = jnp.sum(jnp.where(valid, lse - picked, 0.0))
    cnt = jnp.sum(valid.astype(jnp.float32))
    return loss_sum / jnp.maximum(cnt, 1.0)


# ----------------------------------------------------------------------------
# KnowBertForPreTraining.forward
# ----------------------------------------------------------------------------
def knowbert_for_pretraining_forward(knowbert_output, params,
                                     lm_label_ids, next_sentence_label):
    """knowbert_output: dict with 'loss', 'contextual_embeddings' (B,S,H),
    'pooled_output' (B,H)."""
    loss = knowbert_output["loss"]
    ctx = knowbert_output["contextual_embeddings"]
    pooled = knowbert_output["pooled_output"]

    if lm_label_ids is None and next_sentence_label is None:
        return loss

    bsz, seq, hid = ctx.shape
    x_flat = ctx.reshape(bsz * seq, hid)

    if lm_label_ids is not None:
        labels_flat = lm_label_ids["lm_labels"].reshape(-1).astype(jnp.int32)
        masked_lm_loss = mlm_head_loss(
            x_flat, labels_flat,
            params["wt"], params["bt"], params["gamma"], params["beta"],
            params["wdec"], params["bdec"])
    else:
        masked_lm_loss = 0.0

    if next_sentence_label is not None:
        next_sentence_loss = nsp_head_loss(
            pooled, next_sentence_label.reshape(-1).astype(jnp.int32),
            params["w_nsp"], params["b_nsp"])
    else:
        next_sentence_loss = 0.0

    return loss + masked_lm_loss + next_sentence_loss


# Pure-JAX reference of the same heads + losses (mirrors the kernel's bf16
# matmul casts so only reduction-order differences remain).
def _reference(knowbert_output, params, lm_label_ids, next_sentence_label):
    ctx = knowbert_output["contextual_embeddings"]
    pooled = knowbert_output["pooled_output"]
    bsz, seq, hid = ctx.shape
    x = ctx.reshape(bsz * seq, hid).astype(jnp.bfloat16)
    h = jnp.dot(x, params["wt"].astype(jnp.bfloat16),
                preferred_element_type=jnp.float32) + params["bt"]
    h = _gelu(h)
    mu = h.mean(-1, keepdims=True)
    var = ((h - mu) ** 2).mean(-1, keepdims=True)
    ln = params["gamma"] * (h - mu) * lax.rsqrt(var + LN_EPS) + params["beta"]
    logits = jnp.dot(ln.astype(jnp.bfloat16), params["wdec"].astype(jnp.bfloat16),
                     preferred_element_type=jnp.float32) + params["bdec"]
    labels = lm_label_ids["lm_labels"].reshape(-1)
    lse = jax.scipy.special.logsumexp(logits, axis=-1)
    picked = jnp.take_along_axis(logits, labels[:, None], axis=-1)[:, 0]
    valid = labels != 0
    mlm = jnp.sum(jnp.where(valid, lse - picked, 0.0)) / jnp.maximum(valid.sum(), 1)

    nsp_logits = pooled.astype(jnp.float32) @ params["w_nsp"] + params["b_nsp"]
    nl = next_sentence_label.reshape(-1)
    lse2 = jax.scipy.special.logsumexp(nsp_logits, axis=-1)
    picked2 = jnp.take_along_axis(nsp_logits, jnp.maximum(nl, 0)[:, None], axis=-1)[:, 0]
    valid2 = nl != -1
    nsp = jnp.sum(jnp.where(valid2, lse2 - picked2, 0.0)) / jnp.maximum(valid2.sum(), 1)
    return knowbert_output["loss"] + mlm + nsp


if __name__ == "__main__":
    B, S, H, V = 2, 8, 32, 128
    key = jax.random.PRNGKey(0)
    k = jax.random.split(key, 10)

    # Synthetic outputs of the injected knowbert_model submodule.
    knowbert_output = {
        "loss": jnp.float32(0.37),  # e.g. entity-linker loss from the base model
        "contextual_embeddings": 0.5 * jax.random.normal(k[0], (B, S, H), jnp.float32),
        "pooled_output": jax.random.normal(k[1], (B, H), jnp.float32),
    }

    # Deterministic pretraining-head parameters (shapes per BertPreTrainingHeads).
    params = {
        "wt": 0.02 * jax.random.normal(k[2], (H, H), jnp.float32),
        "bt": 0.02 * jax.random.normal(k[3], (H,), jnp.float32),
        "gamma": jnp.ones((H,), jnp.float32),
        "beta": jnp.zeros((H,), jnp.float32),
        "wdec": 0.02 * jax.random.normal(k[4], (H, V), jnp.float32),  # tied emb, transposed
        "bdec": 0.02 * jax.random.normal(k[5], (V,), jnp.float32),
        "w_nsp": 0.02 * jax.random.normal(k[6], (H, 2), jnp.float32),
        "b_nsp": 0.02 * jax.random.normal(k[7], (2,), jnp.float32),
    }

    # Labels: 0 = ignored (padding / unmasked), otherwise vocab id in [1, V).
    lm_labels = jax.random.randint(k[8], (B, S), 0, V, dtype=jnp.int32)
    lm_labels = lm_labels.at[:, ::3].set(0)          # some ignored positions
    lm_label_ids = {"lm_labels": lm_labels}
    next_sentence_label = jnp.array([0, 1], dtype=jnp.int32)

    total_loss = knowbert_for_pretraining_forward(
        knowbert_output, params, lm_label_ids, next_sentence_label)
    total_loss = jax.block_until_ready(total_loss)

    ref = _reference(knowbert_output, params, lm_label_ids, next_sentence_label)
    assert jnp.allclose(total_loss, ref, atol=2e-3, rtol=2e-3), (total_loss, ref)

    # TODO(synk): the injected knowbert_model forward itself is outside this
    # module's definition and is simulated with synthetic tensors above.
    print("KERNEL_OK")
</pallas_src>

<mosaic_0001>
module attributes {stable_mosaic.version = 11 : i64} {
  func.func @mlm_transform_kernel(%arg0: i32, %arg1: memref<16x32xbf16, #tpu.memory_space<vmem>>, %arg2: memref<32x32xbf16, #tpu.memory_space<vmem>>, %arg3: memref<1x32xf32, #tpu.memory_space<vmem>>, %arg4: memref<1x32xf32, #tpu.memory_space<vmem>>, %arg5: memref<1x32xf32, #tpu.memory_space<vmem>>, %arg6: memref<16x32xbf16, #tpu.memory_space<vmem>>) attributes {dimension_semantics = [#tpu.dimension_semantics<parallel>], iteration_bounds = array<i64: 1>, scalar_prefetch = 0 : i64, scratch_operands = 0 : i64, tpu.core_type = #tpu.core_type<tc>, window_params = [{transform_indices = @transform_0, window_bounds = array<i64: 16, 32>}, {pipeline_mode = #tpu.pipeline_mode<synchronous>, transform_indices = @transform_1, window_bounds = array<i64: 32, 32>}, {pipeline_mode = #tpu.pipeline_mode<synchronous>, transform_indices = @transform_2, window_bounds = array<i64: 1, 32>}, {pipeline_mode = #tpu.pipeline_mode<synchronous>, transform_indices = @transform_3, window_bounds = array<i64: 1, 32>}, {pipeline_mode = #tpu.pipeline_mode<synchronous>, transform_indices = @transform_4, window_bounds = array<i64: 1, 32>}, {transform_indices = @transform_5, window_bounds = array<i64: 16, 32>}]} {
    %c0 = arith.constant 0 : index
    %c0_0 = arith.constant 0 : index
    %0 = vector.load %arg1[%c0, %c0_0] : memref<16x32xbf16, #tpu.memory_space<vmem>>, vector<16x32xbf16>
    %c0_1 = arith.constant 0 : index
    %c0_2 = arith.constant 0 : index
    %1 = vector.load %arg2[%c0_1, %c0_2] : memref<32x32xbf16, #tpu.memory_space<vmem>>, vector<32x32xbf16>
    %cst = arith.constant dense<0.000000e+00> : vector<16x32xf32>
    %2 = tpu.matmul %0, %1, %cst {dimension_numbers = #tpu.dot_dimension_numbers<[1], [0], [0], [1], [0, 0, 1, 1], [], []>} : vector<16x32xbf16>, vector<32x32xbf16>, vector<16x32xf32> -> vector<16x32xf32>
    %c0_3 = arith.constant 0 : index
    %c0_4 = arith.constant 0 : index
    %3 = vector.load %arg3[%c0_3, %c0_4] : memref<1x32xf32, #tpu.memory_space<vmem>>, vector<1x32xf32>
    %4 = vector.broadcast %3 : vector<1x32xf32> to vector<16x32xf32>
    %5 = arith.addf %2, %4 : vector<16x32xf32>
    %cst_5 = arith.constant 5.000000e-01 : f32
    %6 = vector.broadcast %cst_5 : f32 to vector<16x32xf32>
    %7 = arith.mulf %6, %5 : vector<16x32xf32>
    %cst_6 = arith.constant 4.471500e-02 : f32
    %8 = vector.broadcast %cst_6 : f32 to vector<16x32xf32>
    %9 = arith.mulf %8, %5 : vector<16x32xf32>
    %10 = arith.mulf %9, %5 : vector<16x32xf32>
    %11 = arith.mulf %10, %5 : vector<16x32xf32>
    %12 = arith.addf %5, %11 : vector<16x32xf32>
    %cst_7 = arith.constant 0.797884583 : f32
    %13 = vector.broadcast %cst_7 : f32 to vector<16x32xf32>
    %14 = arith.mulf %13, %12 : vector<16x32xf32>
    %15 = math.tanh %14 : vector<16x32xf32>
    %cst_8 = arith.constant 1.000000e+00 : f32
    %16 = vector.broadcast %cst_8 : f32 to vector<16x32xf32>
    %17 = arith.addf %16, %15 : vector<16x32xf32>
    %18 = arith.mulf %7, %17 : vector<16x32xf32>
    %cst_9 = arith.constant dense<0.000000e+00> : vector<16xf32>
    %19 = vector.multi_reduction <add>, %18, %cst_9 [1] : vector<16x32xf32> to vector<16xf32>
    %20 = vector.shape_cast %19 : vector<16xf32> to vector<16x1xf32>
    %cst_10 = arith.constant 3.200000e+01 : f32
    %21 = vector.broadcast %cst_10 : f32 to vector<16x1xf32>
    %22 = arith.divf %20, %21 : vector<16x1xf32>
    %23 = vector.broadcast %22 : vector<16x1xf32> to vector<16x32xf32>
    %24 = arith.subf %18, %23 : vector<16x32xf32>
    %25 = arith.mulf %24, %24 : vector<16x32xf32>
    %cst_11 = arith.constant dense<0.000000e+00> : vector<16xf32>
    %26 = vector.multi_reduction <add>, %25, %cst_11 [1] : vector<16x32xf32> to vector<16xf32>
    %27 = vector.shape_cast %26 : vector<16xf32> to vector<16x1xf32>
    %cst_12 = arith.constant 3.200000e+01 : f32
    %28 = vector.broadcast %cst_12 : f32 to vector<16x1xf32>
    %29 = arith.divf %27, %28 : vector<16x1xf32>
    %c0_13 = arith.constant 0 : index
    %c0_14 = arith.constant 0 : index
    %30 = vector.load %arg4[%c0_13, %c0_14] : memref<1x32xf32, #tpu.memory_space<vmem>>, vector<1x32xf32>
    %31 = vector.broadcast %22 : vector<16x1xf32> to vector<16x32xf32>
    %32 = arith.subf %18, %31 : vector<16x32xf32>
    %33 = vector.broadcast %30 : vector<1x32xf32> to vector<16x32xf32>
    %34 = arith.mulf %33, %32 : vector<16x32xf32>
    %cst_15 = arith.constant 9.99999996E-13 : f32
    %35 = vector.broadcast %cst_15 : f32 to vector<16x1xf32>
    %36 = arith.addf %29, %35 : vector<16x1xf32>
    %37 = math.rsqrt %36 : vector<16x1xf32>
    %38 = vector.broadcast %37 : vector<16x1xf32> to vector<16x32xf32>
    %39 = arith.mulf %34, %38 : vector<16x32xf32>
    %c0_16 = arith.constant 0 : index
    %c0_17 = arith.constant 0 : index
    %40 = vector.load %arg5[%c0_16, %c0_17] : memref<1x32xf32, #tpu.memory_space<vmem>>, vector<1x32xf32>
    %41 = vector.broadcast %40 : vector<1x32xf32> to vector<16x32xf32>
    %42 = arith.addf %39, %41 : vector<16x32xf32>
    %43 = arith.truncf %42 : vector<16x32xf32> to vector<16x32xbf16>
    %c0_18 = arith.constant 0 : index
    %c0_19 = arith.constant 0 : index
    %44 = vector.load %arg6[%c0_18, %c0_19] : memref<16x32xbf16, #tpu.memory_space<vmem>>, vector<16x32xbf16>
    tpu.vector_store %arg6[%c0_18, %c0_19], %43 {strides = array<i32>} : memref<16x32xbf16, #tpu.memory_space<vmem>>, vector<16x32xbf16>,
    return
  }
  func.func @transform_0(%arg0: i32) -> (i32, i32) {
    %c0_i32 = arith.constant 0 : i32
    %c0_i32_0 = arith.constant 0 : i32
    return %arg0, %c0_i32 : i32, i32
  }
  func.func @transform_1(%arg0: i32) -> (i32, i32) {
    %c0_i32 = arith.constant 0 : i32
    %c0_i32_0 = arith.constant 0 : i32
    %c0_i32_1 = arith.constant 0 : i32
    return %c0_i32, %c0_i32_0 : i32, i32
  }
  func.func @transform_2(%arg0: i32) -> (i32, i32) {
    %c0_i32 = arith.constant 0 : i32
    %c0_i32_0 = arith.constant 0 : i32
    %c0_i32_1 = arith.constant 0 : i32
    return %c0_i32, %c0_i32_0 : i32, i32
  }
  func.func @transform_3(%arg0: i32) -> (i32, i32) {
    %c0_i32 = arith.constant 0 : i32
    %c0_i32_0 = arith.constant 0 : i32
    %c0_i32_1 = arith.constant 0 : i32
    return %c0_i32, %c0_i32_0 : i32, i32
  }
  func.func @transform_4(%arg0: i32) -> (i32, i32) {
    %c0_i32 = arith.constant 0 : i32
    %c0_i32_0 = arith.constant 0 : i32
    %c0_i32_1 = arith.constant 0 : i32
    return %c0_i32, %c0_i32_0 : i32, i32
  }
  func.func @transform_5(%arg0: i32) -> (i32, i32) {
    %c0_i32 = arith.constant 0 : i32
    %c0_i32_0 = arith.constant 0 : i32
    return %arg0, %c0_i32 : i32, i32
  }
}

</mosaic_0001>

<llo_original>
// kernel: tpu_custom_call.1
$region0: #{tpu_custom_call.1}
  #allocation0 [shape = 'u32[]', space=smem, size = 0x4, offset = 0x4, fixed_abs, tag = 'smem constant byte address 0x4 - core index']
  #allocation1 [shape = 'u32[72,128]{1,0:T(1,128)}', space=vmem, size = 0x9000, scoped, tag = 'internal scratch']
  %s0 = inlined_call_operand.hbm [shape: bf16[16,32], index: 0, kind: input, shape index: {}]
  %s1 = inlined_call_operand.hbm [shape: bf16[32,32], index: 1, kind: input, shape index: {}]
  %s2 = inlined_call_operand.vmem [shape: f32[1,32], index: 2, kind: input, shape index: {}]
  %s3 = inlined_call_operand.vmem [shape: f32[1,32], index: 3, kind: input, shape index: {}]
  %s4 = inlined_call_operand.vmem [shape: f32[1,32], index: 4, kind: input, shape index: {}]
  %s5 = inlined_call_operand.hbm [shape: bf16[16,32], index: 5, kind: output, shape index: {}]
  %s6 = sld [smem:[#allocation0]]
  $region38: #{tpu_custom_call.1} parent=0
    _
  %s8 = ssub.s32 1, %s6
  %s9 = scalar_select 0, %s8, %s6
  $region1: #{tpu_custom_call.1} parent=0
    #allocation2 [shape = 'u8[4096]{0}', space=vmem, size = 0x1000, scoped, tag = 'input window, operand 0, single buffered']
    #allocation3 [shape = 's32[1]{0}', space=sflag, size = 0x4, scoped, tag = 'scoped memory for tpu_custom_call.1']
    #allocation4 [shape = 's32[1]{0}', space=sflag, size = 0x4, scoped, tag = 'scoped memory for tpu_custom_call.1']
    #allocation5 [shape = 'u8[8192]{0}', space=vmem, size = 0x2000, scoped, tag = 'input window, operand 1, single buffered']
    #allocation6 [shape = 's32[1]{0}', space=sflag, size = 0x4, scoped, tag = 'scoped memory for tpu_custom_call.1']
    #allocation7 [shape = 'u8[4096]{0}', space=vmem, size = 0x1000, scoped, tag = 'output window, operand 0, single buffered']
    %10 = vsyncpa [#allocation3], 0
    %11 = vsyncpa [#allocation6], 0
    %12 = vsyncpa [#allocation4], 0
    // Predicated region
    $region2: #{tpu_custom_call.1} parent=1 // pred_check
      _
    $region3: #{tpu_custom_call.1} parent=1 // pred_check_branch
      %14 = sbr.rel (0) target = $region5
    $region4: #{tpu_custom_call.1} parent=1 // pred_region
      %16 = vsyncadd [#allocation3], 0
      %s17 = sshll.u32 %s0, 4
      %s18 = int_to_ptr.hbm [resolvable:$true] %s17
      %s19 = sshll.u32 [#allocation2], 4
      %s20 = int_to_ptr.vmem [resolvable:$true] %s19
      %25 = dma.hbm_to_vmem [thread:$0]  %s18, 128, %s20, [#allocation3], 64, 64, 4
    $region5: #{tpu_custom_call.1} parent=1 // pred_fallthru
      _
    // Predicated region
    $region6: #{tpu_custom_call.1} parent=1 // pred_check
      _
    $region7: #{tpu_custom_call.1} parent=1 // pred_check_branch
      %27 = sbr.rel (0) target = $region9
    $region8: #{tpu_custom_call.1} parent=1 // pred_region
      %29 = vsyncadd [#allocation6], 0
      %s30 = sshll.u32 %s1, 4
      %s31 = int_to_ptr.hbm [resolvable:$true] %s30
      %s32 = sshll.u32 [#allocation5], 4
      %s33 = int_to_ptr.vmem [resolvable:$true] %s32
      %38 = dma.hbm_to_vmem [thread:$0]  %s31, 256, %s33, [#allocation6], 64, 64, 4
    $region9: #{tpu_custom_call.1} parent=1 // pred_fallthru
      _
    // Predicated region
    $region10: #{tpu_custom_call.1} parent=1 // pred_check
      _
    $region11: #{tpu_custom_call.1} parent=1 // pred_check_branch
      %40 = sbr.rel (0) target = $region13
    $region12: #{tpu_custom_call.1} parent=1 // pred_region
      _
    $region13: #{tpu_custom_call.1} parent=1 // pred_fallthru
      _
    // Predicated region
    $region14: #{tpu_custom_call.1} parent=1 // pred_check
      _
    $region15: #{tpu_custom_call.1} parent=1 // pred_check_branch
      %42 = sbr.rel (0) target = $region17
    $region16: #{tpu_custom_call.1} parent=1 // pred_region
      _
    $region17: #{tpu_custom_call.1} parent=1 // pred_fallthru
      _
    // Predicated region
    $region18: #{tpu_custom_call.1} parent=1 // pred_check
      _
    $region19: #{tpu_custom_call.1} parent=1 // pred_check_branch
      %44 = sbr.rel (0) target = $region21
    $region20: #{tpu_custom_call.1} parent=1 // pred_region
      _
    $region21: #{tpu_custom_call.1} parent=1 // pred_fallthru
      _
    // Predicated region
    $region22: #{tpu_custom_call.1} parent=1 // pred_check
      _
    $region23: #{tpu_custom_call.1} parent=1 // pred_check_branch
      %46 = sbr.rel (0) target = $region25
    $region24: #{tpu_custom_call.1} parent=1 // pred_region
      %48 = dma.done [#allocation3], 128
    $region25: #{tpu_custom_call.1} parent=1 // pred_fallthru
      _
    // Predicated region
    $region26: #{tpu_custom_call.1} parent=1 // pred_check
      _
    $region27: #{tpu_custom_call.1} parent=1 // pred_check_branch
      %50 = sbr.rel (0) target = $region29
    $region28: #{tpu_custom_call.1} parent=1 // pred_region
      %52 = dma.done [#allocation6], 256
    $region29: #{tpu_custom_call.1} parent=1 // pred_fallthru
      _
    %v54 = vld [vmem:[#allocation2] sm:$0xf]
    %v55 = vld [vmem:[#allocation2 + $0x4] sm:$0xf]
    %v56 = vld [vmem:[#allocation5] sm:$0xf]
    %v57 = vld [vmem:[#allocation5 + $0x4] sm:$0xf]
    %v58 = vld [vmem:[#allocation5 + $0x8] sm:$0xf]
    %v59 = vld [vmem:[#allocation5 + $0xc] sm:$0xf]
    %v60 = vld [vmem:[%s2] sm:$0x1]
    %v62 = vperm.slane %v60, 0
    %v66 = vunpack.c.l.b16 %v54
    %v67 = vunpack.c.l.b16 %v55
    %v68 = vpack.c.b16 %v67, %v66
    %v73 = vunpack.c.l.b16 %v56
    %v74 = vunpack.c.l.b16 %v57
    %v75 = vunpack.c.l.b16 %v58
    %v76 = vunpack.c.l.b16 %v59
    %v77 = vpack.c.b16 %v74, %v73
    %v78 = vpack.c.b16 %v76, %v75
    %vm81 = vcmask 261120
    %v83 = vsel %vm81, %v68, 0
    %85 = vmatpush.bf16.msra.mxu0 0
    %86 = vmatpush.bf16.msra.mxu0 0
    %87 = vmatpush.bf16.msra.mxu0 0
    %88 = vmatpush.bf16.msra.mxu0 0
    %89 = vmatpush.bf16.msra.mxu0 0
    %90 = vmatpush.bf16.msra.mxu0 0
    %91 = vmatpush.bf16.msra.mxu0 %v78
    %92 = vmatpush.bf16.msra.mxu0 %v77
    %93 = vmatmul.bf16.gmra.mxu0 %v83
    %v94 = vpop.f32.mrf.mxu0
    %v95 = vadd.f32 %v62, %v94
    %v96 = vpop.f32.mrf.mxu0
    %v97 = vadd.f32 %v62, %v96
    %98 = vdwg.mxu0
    %v99 = vmul.f32 %v95, 0.5
    %v100 = vmul.f32 %v97, 0.5
    %v101 = vmul.f32 %v95, 0.044715
    %v102 = vmul.f32 %v97, 0.044715
    %v103 = vmul.f32 %v101, %v95
    %v104 = vmul.f32 %v102, %v97
    %v105 = vmul.f32 %v103, %v95
    %v106 = vmul.f32 %v104, %v97
    %v107 = vadd.f32 %v95, %v105
    %v108 = vadd.f32 %v97, %v106
    %v109 = vmul.f32 %v107, 0.7978846
    %v110 = vmul.f32 %v108, 0.7978846
    %v111 = vtanh.pop %v109
    %v112 = vtanh.pop %v110
    %v113 = vadd.f32 %v111, 1.0
    %v114 = vadd.f32 %v112, 1.0
    %v115 = vmul.f32 %v99, %v113
    %v116 = vmul.f32 %v100, %v114
    %v117 = vsel %vm81, %v115, 0.0
    %118 = vadd.xlane.f32.xlu0 %v117
    %v119 = vpop.xlane.xlu0 %118
    %v120 = vsel %vm81, %v116, 0.0
    %121 = vadd.xlane.f32.xlu0 %v120
    %v122 = vpop.xlane.xlu0 %121
    %v123 = vrcp.pop 32.0
    %v124 = vmul.f32 32.0, %v123
    %v125 = vsub.f32 1.0, %v124
    %v126 = vmul.f32 %v123, %v125
    %v127 = vadd.f32 %v123, %v126
    %vm128 = vweird.f32 %v123
    %v129 = vsel %vm128, %v123, %v127
    %v130 = vmul.f32 %v119, %v129
    %v131 = vmul.f32 %v122, %v129
    %v132 = vsub.f32 %v115, %v130
    %v133 = vsub.f32 %v116, %v131
    %v134 = vmul.f32 %v132, %v132
    %v135 = vmul.f32 %v133, %v133
    %v136 = vsel %vm81, %v134, 0.0
    %137 = vadd.xlane.f32.xlu0 %v136
    %v138 = vpop.xlane.xlu0 %137
    %v139 = vsel %vm81, %v135, 0.0
    %140 = vadd.xlane.f32.xlu0 %v139
    %v141 = vpop.xlane.xlu0 %140
    %v142 = vmul.f32 %v138, %v129
    %v143 = vmul.f32 %v141, %v129
    %v144 = vld [vmem:[%s3] sm:$0x1]
    %v146 = vperm.slane %v144, 0
    %v148 = vmul.f32 %v146, %v132
    %v149 = vmul.f32 %v146, %v133
    %v150 = vadd.f32 %v142, 1e-12
    %v151 = vadd.f32 %v143, 1e-12
    %v152 = vrsqrt.pop %v150
    %v153 = vmul.f32 %v152, %v150
    %v154 = vmul.f32 %v153, %v152
    %v155 = vmul.f32 0.5, %v154
    %v156 = vsub.f32 1.5, %v155
    %v157 = vmul.f32 %v152, %v156
    %vm158 = vweird.f32 %v150
    %vm159 = vweird.f32 %v152
    %vm160 = vmor %vm158, %vm159
    %v161 = vsel %vm160, %v152, %v157
    %v162 = vrsqrt.pop %v151
    %v163 = vmul.f32 %v162, %v151
    %v164 = vmul.f32 %v163, %v162
    %v165 = vmul.f32 0.5, %v164
    %v166 = vsub.f32 1.5, %v165
    %v167 = vmul.f32 %v162, %v166
    %vm168 = vweird.f32 %v151
    %vm169 = vweird.f32 %v162
    %vm170 = vmor %vm168, %vm169
    %v171 = vsel %vm170, %v162, %v167
    %v172 = vmul.f32 %v148, %v161
    %v173 = vmul.f32 %v149, %v171
    %v174 = vld [vmem:[%s4] sm:$0x1]
    %v176 = vperm.slane %v174, 0
    %v178 = vadd.f32 %v172, %v176
    %v179 = vadd.f32 %v173, %v176
    %v180 = vpack.c.bf16 %v178, %v178
    %v181 = vpack.c.bf16 %v179, %v179
    %vm182 = vcmask 257024
    %183 = vst.msk [vmem:[#allocation7] sm:$0xf] %vm182, %v180
    %184 = vst.msk [vmem:[#allocation7 + $0x4] sm:$0xf] %vm182, %v181
    // Predicated region
    $region30: #{tpu_custom_call.1} parent=1 // pred_check
      _
    $region31: #{tpu_custom_call.1} parent=1 // pred_check_branch
      %186 = sbr.rel (0) target = $region33
    $region32: #{tpu_custom_call.1} parent=1 // pred_region
      %188 = vsyncadd [#allocation4], 0
      %s189 = sshll.u32 [#allocation7], 4
      %s190 = int_to_ptr.vmem [resolvable:$true] %s189
      %s191 = sshll.u32 %s5, 4
      %s192 = int_to_ptr.hbm [resolvable:$true] %s191
      %197 = dma.vmem_to_hbm [thread:$0]  %s190, 128, %s192, [#allocation4], 64, 64, 4
    $region33: #{tpu_custom_call.1} parent=1 // pred_fallthru
      _
    // Predicated region
    $region34: #{tpu_custom_call.1} parent=1 // pred_check
      _
    $region35: #{tpu_custom_call.1} parent=1 // pred_check_branch
      %199 = sbr.rel (0) target = $region37
    $region36: #{tpu_custom_call.1} parent=1 // pred_region
      %201 = dma.done [#allocation4], 128
    $region37: #{tpu_custom_call.1} parent=1 // pred_fallthru
      _
    %202 = vsyncpa [#allocation3], 1
    %203 = vsyncpa [#allocation6], 1
    %204 = vsyncpa [#allocation4], 1

</llo_original>
